<compile_context>
chip_gen: v5e
topology: v5e:2x2
jax: 0.10.0
libtpu: 0.0.40
codegen_flags: <defaults>
</compile_context>

<pallas_src>
import jax
import jax.numpy as jnp
from jax.experimental import pallas as pl
from jax.experimental.pallas import tpu as pltpu


def _round_up(x, m):
    return ((x + m - 1) // m) * m


# ---------------------------------------------------------------------------
# Forward kernel:  R[b] = dot(U[U_ids[b]], V[I_ids[b]])
#
# Layout: factor tables are K-major (K sublanes, table rows on lanes); the
# gather is a one-hot matmul  U^T @ onehot(ids)  -> (K, tb), and the per-id dot
# product is an elementwise mul + sublane reduce -> lane-dense (1, tb) output.
# ---------------------------------------------------------------------------
def _amf_forward_kernel(uid_ref, iid_ref, ut_ref, vt_ref, o_ref):
    # uid_ref / iid_ref : (1, tb) int32 ids for this tile
    # ut_ref            : (K, n_users) f32   (resident; constant block index)
    # vt_ref            : (K, n_items) f32   (resident; constant block index)
    # o_ref             : (1, tb) f32        (lane-dense output)
    n_users = ut_ref.shape[1]
    n_items = vt_ref.shape[1]
    tb = uid_ref.shape[1]

    row_u = jax.lax.broadcasted_iota(jnp.int32, (n_users, tb), 0)
    row_i = jax.lax.broadcasted_iota(jnp.int32, (n_items, tb), 0)
    oh_u = (row_u == uid_ref[...]).astype(jnp.float32)          # (n_users, tb)
    oh_i = (row_i == iid_ref[...]).astype(jnp.float32)          # (n_items, tb)

    # Gather as columns via MXU: (K, n) @ (n, tb) -> (K, tb)
    ug = jnp.dot(ut_ref[...], oh_u, preferred_element_type=jnp.float32)
    vg = jnp.dot(vt_ref[...], oh_i, preferred_element_type=jnp.float32)

    # Per-id dot product: elementwise mul + sublane reduce -> (1, tb)
    o_ref[...] = jnp.sum(ug * vg, axis=0, keepdims=True)


def amf_forward(U, V, U_ids, I_ids, *, tb_max=1024):
    """R[b] = dot(U[U_ids[b]], V[I_ids[b]]) — gather fused into the kernel."""
    f32 = jnp.float32
    Ut = U.astype(f32).T                      # (K, n_users) — glue transpose
    Vt = V.astype(f32).T                      # (K, n_items)
    K, n_users = Ut.shape
    _, n_items = Vt.shape

    B = int(U_ids.shape[0])
    tb = min(tb_max, _round_up(B, 128))       # lane-dense tiles (>=128 lanes)
    B_pad = _round_up(B, tb)
    n_tiles = pl.cdiv(B_pad, tb)

    uid = jnp.zeros((1, B_pad), jnp.int32).at[0, :B].set(U_ids.astype(jnp.int32))
    iid = jnp.zeros((1, B_pad), jnp.int32).at[0, :B].set(I_ids.astype(jnp.int32))

    # TODO(synk): for factor tables too large to keep resident in VMEM, replace
    # the one-hot-matmul gather with a manual DMA-gather (pl.ANY + async copies).
    out = pl.pallas_call(
        _amf_forward_kernel,
        out_shape=jax.ShapeDtypeStruct((1, B_pad), f32),
        grid_spec=pltpu.PrefetchScalarGridSpec(
            num_scalar_prefetch=0,
            grid=(n_tiles,),
            in_specs=[
                pl.BlockSpec((1, tb), lambda i: (0, i)),
                pl.BlockSpec((1, tb), lambda i: (0, i)),
                pl.BlockSpec((K, n_users), lambda i: (0, 0)),   # resident
                pl.BlockSpec((K, n_items), lambda i: (0, 0)),   # resident
            ],
            out_specs=pl.BlockSpec((1, tb), lambda i: (0, i)),
        ),
        compiler_params=pltpu.CompilerParams(
            dimension_semantics=("parallel",)),
    )(uid, iid, Ut, Vt)
    return out[0, :B]                          # (B,)


# ---------------------------------------------------------------------------
# Objective / compute_loss:
#   J = 0.5*||R - U V^T||_F^2 + 0.5*g1*||P - U X^T||_F^2
#     + 0.5*g2*||Q - V Y^T||_F^2
#     + 0.5*l1*(||U||^2 + ||V||^2 + ||X||^2 + ||Y||^2)
#
# Tiled over R with a 2-D grid (i = user-row tiles, j = item-col tiles).
# Per-i partial sums are accumulated in the resident output block; the P-term
# and U-reg are added once per i (at j==0), the Q-term and V-reg once per j
# (at i==0), and the X/Y reg once (at i==0, j==0).  All padding is zeros, which
# contributes exactly zero to every term.
# ---------------------------------------------------------------------------
def _make_loss_kernel(gamma1, gamma2, lambda1):
    def _loss_kernel(r_ref, p_ref, qt_ref, u_ref, vt_ref, xt_ref, y_ref, o_ref):
        i = pl.program_id(0)
        j = pl.program_id(1)

        u = u_ref[...]                 # (tm, K)
        vt = vt_ref[...]               # (K, tn)

        @pl.when(j == 0)
        def _init():
            o_ref[...] = jnp.zeros_like(o_ref)

        @pl.when(j == 0)
        def _row_terms():              # P residual + U regularization, once per i
            presid = p_ref[...] - jnp.dot(u, xt_ref[...],
                                          preferred_element_type=jnp.float32)
            o_ref[...] += (0.5 * gamma1 * jnp.sum(presid * presid)
                           + 0.5 * lambda1 * jnp.sum(u * u))

        @pl.when(i == 0)
        def _col_terms():              # Q residual + V regularization, once per j
            qresid = qt_ref[...] - jnp.dot(y_ref[...], vt,
                                           preferred_element_type=jnp.float32)
            o_ref[...] += (0.5 * gamma2 * jnp.sum(qresid * qresid)
                           + 0.5 * lambda1 * jnp.sum(vt * vt))

        @pl.when((i == 0) & (j == 0))
        def _xy_reg():                 # X / Y regularization, once
            o_ref[...] += 0.5 * lambda1 * (jnp.sum(xt_ref[...] ** 2)
                                           + jnp.sum(y_ref[...] ** 2))

        # Main streamed term: 0.5 * || R_tile - U_i V_j^T ||^2
        resid = r_ref[...] - jnp.dot(u, vt, preferred_element_type=jnp.float32)
        o_ref[...] += 0.5 * jnp.sum(resid * resid)

    return _loss_kernel


def amf_compute_loss(R, P, Q, U, V, X, Y, *, gamma1, gamma2, lambda1,
                     tm=512, tn=1024):
    f32 = jnp.float32
    R, P, Q = R.astype(f32), P.astype(f32), Q.astype(f32)
    U, V, X, Y = U.astype(f32), V.astype(f32), X.astype(f32), Y.astype(f32)

    n_users, n_items = R.shape
    K = U.shape[1]
    L = X.shape[0]

    tm = min(tm, _round_up(n_users, 8))       # sublane-aligned row tile
    tn = min(tn, _round_up(n_items, 128))     # lane-dense column tile
    m_pad = _round_up(n_users, tm)
    n_pad = _round_up(n_items, tn)
    gi, gj = m_pad // tm, n_pad // tn

    def pad2(a, rows, cols):
        pr, pc = rows - a.shape[0], cols - a.shape[1]
        if pr or pc:
            a = jnp.pad(a, ((0, pr), (0, pc)))
        return a

    Rp = pad2(R, m_pad, n_pad)                # streamed
    Pp = pad2(P, m_pad, L)
    Qtp = pad2(Q.T, L, n_pad)                 # pre-transposed: no in-kernel transpose
    Up = pad2(U, m_pad, K)
    Vtp = pad2(V.T, K, n_pad)                 # V passed only once (as V^T)
    Xt = X.T                                  # (K, L), resident
    # Y stays (L, K), resident

    kernel = _make_loss_kernel(float(gamma1), float(gamma2), float(lambda1))

    # Output: one (8, 128) slot per row-tile i (keeps the block (8,128)-aligned,
    # unmasked stores).  Every element of a slot holds that row-tile's partial
    # loss; the wrapper reads one element per slot and sums the tiny vector.
    partial = pl.pallas_call(
        kernel,
        out_shape=jax.ShapeDtypeStruct((8 * gi, 128), f32),
        grid_spec=pltpu.PrefetchScalarGridSpec(
            num_scalar_prefetch=0,
            grid=(gi, gj),
            in_specs=[
                pl.BlockSpec((tm, tn), lambda i, j: (i, j)),   # R tile (streamed)
                pl.BlockSpec((tm, L), lambda i, j: (i, 0)),    # P rows
                pl.BlockSpec((L, tn), lambda i, j: (0, j)),    # Q^T cols
                pl.BlockSpec((tm, K), lambda i, j: (i, 0)),    # U rows
                pl.BlockSpec((K, tn), lambda i, j: (0, j)),    # V^T cols
                pl.BlockSpec((K, L), lambda i, j: (0, 0)),     # X^T (resident)
                pl.BlockSpec((L, K), lambda i, j: (0, 0)),     # Y   (resident)
            ],
            out_specs=pl.BlockSpec((8, 128), lambda i, j: (i, 0)),
        ),
        compiler_params=pltpu.CompilerParams(
            dimension_semantics=("parallel", "arbitrary")),
    )(Rp, Pp, Qtp, Up, Vtp, Xt, Y)

    return jnp.sum(partial[::8, 0])           # sum gi per-row-tile partials


# ---------------------------------------------------------------------------
# Demo / self-check
# ---------------------------------------------------------------------------
if __name__ == "__main__":
    # config (synthetic, deterministic, deliberately non-tile-aligned)
    n_users, n_items, K, L = 200, 300, 8, 16
    gamma1, gamma2, lambda1 = 0.5, 0.5, 0.01
    B = 50  # batch of (user, item) id pairs

    key = jax.random.PRNGKey(0)
    k_u, k_v, k_x, k_y, k_uid, k_iid, k_r, k_p, k_q = jax.random.split(key, 9)

    # Parameters: uniform(-0.1, 0.1), matching nn.Parameter init in __init__.
    U = jax.random.uniform(k_u, (n_users, K), jnp.float32, -0.1, 0.1)
    V = jax.random.uniform(k_v, (n_items, K), jnp.float32, -0.1, 0.1)
    X = jax.random.uniform(k_x, (L, K), jnp.float32, -0.1, 0.1)
    Y = jax.random.uniform(k_y, (L, K), jnp.float32, -0.1, 0.1)

    U_ids = jax.random.randint(k_uid, (B,), 0, n_users, jnp.int32)
    I_ids = jax.random.randint(k_iid, (B,), 0, n_items, jnp.int32)

    # ---- forward pass (the module's forward) ----
    r_pred = jax.block_until_ready(amf_forward(U, V, U_ids, I_ids))
    r_ref = jnp.sum(U[U_ids] * V[I_ids], axis=1)
    assert r_pred.shape == (B,)
    assert jnp.allclose(r_pred, r_ref, atol=1e-6, rtol=1e-5)

    # ---- compute_loss (Objective) ----
    R_full = jax.random.uniform(k_r, (n_users, n_items), jnp.float32, 0.0, 1.0)
    P_full = jax.random.uniform(k_p, (n_users, L), jnp.float32, 0.0, 1.0)
    Q_full = jax.random.uniform(k_q, (n_items, L), jnp.float32, 0.0, 1.0)

    loss_ref = (0.5 * jnp.sum((R_full - U @ V.T) ** 2)
                + 0.5 * gamma1 * jnp.sum((P_full - U @ X.T) ** 2)
                + 0.5 * gamma2 * jnp.sum((Q_full - V @ Y.T) ** 2)
                + 0.5 * lambda1 * (jnp.sum(U ** 2) + jnp.sum(V ** 2)
                                   + jnp.sum(X ** 2) + jnp.sum(Y ** 2)))

    # Small tiles here to exercise the multi-tile accumulation / padding path;
    # production defaults are tm=512, tn=1024.
    loss_small = jax.block_until_ready(
        amf_compute_loss(R_full, P_full, Q_full, U, V, X, Y,
                         gamma1=gamma1, gamma2=gamma2, lambda1=lambda1,
                         tm=64, tn=128))
    assert jnp.allclose(loss_small, loss_ref, rtol=1e-4, atol=1e-2), \
        (loss_small, loss_ref)

    # Default (large-tile) configuration.
    loss_big = jax.block_until_ready(
        amf_compute_loss(R_full, P_full, Q_full, U, V, X, Y,
                         gamma1=gamma1, gamma2=gamma2, lambda1=lambda1))
    assert jnp.allclose(loss_big, loss_ref, rtol=1e-4, atol=1e-2), \
        (loss_big, loss_ref)

    print("KERNEL_OK")
</pallas_src>

<mosaic_0001>
module attributes {stable_mosaic.version = 11 : i64} {
  func.func @_amf_forward_kernel(%arg0: i32, %arg1: memref<1x128xi32, #tpu.memory_space<vmem>>, %arg2: memref<1x128xi32, #tpu.memory_space<vmem>>, %arg3: memref<8x200xf32, #tpu.memory_space<vmem>>, %arg4: memref<8x300xf32, #tpu.memory_space<vmem>>, %arg5: memref<1x128xf32, #tpu.memory_space<vmem>>) attributes {dimension_semantics = [#tpu.dimension_semantics<parallel>], iteration_bounds = array<i64: 1>, scalar_prefetch = 0 : i64, scratch_operands = 0 : i64, tpu.core_type = #tpu.core_type<tc>, window_params = [{transform_indices = @transform_0, window_bounds = array<i64: 1, 128>}, {transform_indices = @transform_1, window_bounds = array<i64: 1, 128>}, {pipeline_mode = #tpu.pipeline_mode<synchronous>, transform_indices = @transform_2, window_bounds = array<i64: 8, 200>}, {pipeline_mode = #tpu.pipeline_mode<synchronous>, transform_indices = @transform_3, window_bounds = array<i64: 8, 300>}, {transform_indices = @transform_4, window_bounds = array<i64: 1, 128>}]} {
    %0 = tpu.iota {dimensions = array<i32: 0>} : vector<200x128xi32>
    %1 = tpu.iota {dimensions = array<i32: 0>} : vector<300x128xi32>
    %c0 = arith.constant 0 : index
    %c0_0 = arith.constant 0 : index
    %2 = vector.load %arg1[%c0, %c0_0] : memref<1x128xi32, #tpu.memory_space<vmem>>, vector<1x128xi32>
    %3 = vector.broadcast %2 : vector<1x128xi32> to vector<200x128xi32>
    %4 = arith.cmpi eq, %0, %3 : vector<200x128xi32>
    %5 = arith.extui %4 : vector<200x128xi1> to vector<200x128xi32>
    %6 = arith.sitofp %5 : vector<200x128xi32> to vector<200x128xf32>
    %c0_1 = arith.constant 0 : index
    %c0_2 = arith.constant 0 : index
    %7 = vector.load %arg2[%c0_1, %c0_2] : memref<1x128xi32, #tpu.memory_space<vmem>>, vector<1x128xi32>
    %8 = vector.broadcast %7 : vector<1x128xi32> to vector<300x128xi32>
    %9 = arith.cmpi eq, %1, %8 : vector<300x128xi32>
    %10 = arith.extui %9 : vector<300x128xi1> to vector<300x128xi32>
    %11 = arith.sitofp %10 : vector<300x128xi32> to vector<300x128xf32>
    %c0_3 = arith.constant 0 : index
    %c0_4 = arith.constant 0 : index
    %12 = vector.load %arg3[%c0_3, %c0_4] : memref<8x200xf32, #tpu.memory_space<vmem>>, vector<8x200xf32>
    %cst = arith.constant dense<0.000000e+00> : vector<8x128xf32>
    %13 = tpu.matmul %12, %6, %cst {dimension_numbers = #tpu.dot_dimension_numbers<[1], [0], [0], [1], [0, 0, 1, 1], [], []>} : vector<8x200xf32>, vector<200x128xf32>, vector<8x128xf32> -> vector<8x128xf32>
    %c0_5 = arith.constant 0 : index
    %c0_6 = arith.constant 0 : index
    %14 = vector.load %arg4[%c0_5, %c0_6] : memref<8x300xf32, #tpu.memory_space<vmem>>, vector<8x300xf32>
    %cst_7 = arith.constant dense<0.000000e+00> : vector<8x128xf32>
    %15 = tpu.matmul %14, %11, %cst_7 {dimension_numbers = #tpu.dot_dimension_numbers<[1], [0], [0], [1], [0, 0, 1, 1], [], []>} : vector<8x300xf32>, vector<300x128xf32>, vector<8x128xf32> -> vector<8x128xf32>
    %16 = arith.mulf %13, %15 : vector<8x128xf32>
    %cst_8 = arith.constant dense<0.000000e+00> : vector<128xf32>
    %17 = vector.multi_reduction <add>, %16, %cst_8 [0] : vector<8x128xf32> to vector<128xf32>
    %18 = vector.shape_cast %17 : vector<128xf32> to vector<1x128xf32>
    %c0_9 = arith.constant 0 : index
    %c0_10 = arith.constant 0 : index
    %19 = vector.load %arg5[%c0_9, %c0_10] : memref<1x128xf32, #tpu.memory_space<vmem>>, vector<1x128xf32>
    tpu.vector_store %arg5[%c0_9, %c0_10], %18 {strides = array<i32>} : memref<1x128xf32, #tpu.memory_space<vmem>>, vector<1x128xf32>,
    return
  }
  func.func @transform_0(%arg0: i32) -> (i32, i32) {
    %c0_i32 = arith.constant 0 : i32
    %c0_i32_0 = arith.constant 0 : i32
    return %c0_i32, %arg0 : i32, i32
  }
  func.func @transform_1(%arg0: i32) -> (i32, i32) {
    %c0_i32 = arith.constant 0 : i32
    %c0_i32_0 = arith.constant 0 : i32
    return %c0_i32, %arg0 : i32, i32
  }
  func.func @transform_2(%arg0: i32) -> (i32, i32) {
    %c0_i32 = arith.constant 0 : i32
    %c0_i32_0 = arith.constant 0 : i32
    %c0_i32_1 = arith.constant 0 : i32
    return %c0_i32, %c0_i32_0 : i32, i32
  }
  func.func @transform_3(%arg0: i32) -> (i32, i32) {
    %c0_i32 = arith.constant 0 : i32
    %c0_i32_0 = arith.constant 0 : i32
    %c0_i32_1 = arith.constant 0 : i32
    return %c0_i32, %c0_i32_0 : i32, i32
  }
  func.func @transform_4(%arg0: i32) -> (i32, i32) {
    %c0_i32 = arith.constant 0 : i32
    %c0_i32_0 = arith.constant 0 : i32
    return %c0_i32, %arg0 : i32, i32
  }
}

</mosaic_0001>

<llo_original>
// kernel: tpu_custom_call.1
$region0: #{tpu_custom_call.1}
  #allocation0 [shape = 'u32[]', space=smem, size = 0x4, offset = 0x4, fixed_abs, tag = 'smem constant byte address 0x4 - core index']
  #allocation1 [shape = 'u32[72,128]{1,0:T(1,128)}', space=vmem, size = 0x9000, scoped, tag = 'internal scratch']
  %s0 = inlined_call_operand.hbm [shape: s32[1,128], index: 0, kind: input, shape index: {}]
  %s1 = inlined_call_operand.hbm [shape: s32[1,128], index: 1, kind: input, shape index: {}]
  %s2 = inlined_call_operand.hbm [shape: f32[8,200], index: 2, kind: input, shape index: {}]
  %s3 = inlined_call_operand.hbm [shape: f32[8,300], index: 3, kind: input, shape index: {}]
  %s4 = inlined_call_operand.hbm [shape: f32[1,128], index: 4, kind: output, shape index: {}]
  %s5 = sld [smem:[#allocation0]]
  $region42: #{tpu_custom_call.1} parent=0
    _
  %s7 = ssub.s32 1, %s5
  %s8 = scalar_select 0, %s7, %s5
  $region1: #{tpu_custom_call.1} parent=0
    #allocation2 [shape = 'u8[512]{0}', space=vmem, size = 0x400, scoped, tag = 'input window, operand 0, single buffered']
    #allocation3 [shape = 's32[1]{0}', space=sflag, size = 0x4, scoped, tag = 'scoped memory for tpu_custom_call.1']
    #allocation4 [shape = 's32[1]{0}', space=sflag, size = 0x4, scoped, tag = 'scoped memory for tpu_custom_call.1']
    #allocation5 [shape = 'u8[512]{0}', space=vmem, size = 0x400, scoped, tag = 'input window, operand 1, single buffered']
    #allocation6 [shape = 's32[1]{0}', space=sflag, size = 0x4, scoped, tag = 'scoped memory for tpu_custom_call.1']
    #allocation7 [shape = 'u8[8192]{0}', space=vmem, size = 0x2000, scoped, tag = 'input window, operand 2, single buffered']
    #allocation8 [shape = 'u8[12288]{0}', space=vmem, size = 0x3000, scoped, tag = 'input window, operand 3, single buffered']
    #allocation9 [shape = 's32[1]{0}', space=sflag, size = 0x4, scoped, tag = 'scoped memory for tpu_custom_call.1']
    #allocation10 [shape = 'u8[512]{0}', space=vmem, size = 0x400, scoped, tag = 'output window, operand 0, single buffered']
    %9 = vsyncpa [#allocation3], 0
    %10 = vsyncpa [#allocation6], 0
    %11 = vsyncpa [#allocation9], 0
    %12 = vsyncpa [#allocation4], 0
    // Predicated region
    $region2: #{tpu_custom_call.1} parent=1 // pred_check
      _
    $region3: #{tpu_custom_call.1} parent=1 // pred_check_branch
      %14 = sbr.rel (0) target = $region5
    $region4: #{tpu_custom_call.1} parent=1 // pred_region
      %16 = vsyncadd [#allocation3], 0
      %s18 = sshll.u32 %s0, 4
      %s19 = int_to_ptr.hbm [resolvable:$true] %s18
      %s20 = sshll.u32 [#allocation2], 4
      %s21 = int_to_ptr.vmem [resolvable:$true] %s20
      %23 = dma.hbm_to_vmem [thread:$0]  %s19, 16, %s21, [#allocation3]
    $region5: #{tpu_custom_call.1} parent=1 // pred_fallthru
      _
    // Predicated region
    $region6: #{tpu_custom_call.1} parent=1 // pred_check
      _
    $region7: #{tpu_custom_call.1} parent=1 // pred_check_branch
      %25 = sbr.rel (0) target = $region9
    $region8: #{tpu_custom_call.1} parent=1 // pred_region
      %27 = vsyncadd [#allocation6], 0
      %s29 = sshll.u32 %s1, 4
      %s30 = int_to_ptr.hbm [resolvable:$true] %s29
      %s31 = sshll.u32 [#allocation5], 4
      %s32 = int_to_ptr.vmem [resolvable:$true] %s31
      %34 = dma.hbm_to_vmem [thread:$0]  %s30, 16, %s32, [#allocation6]
    $region9: #{tpu_custom_call.1} parent=1 // pred_fallthru
      _
    // Predicated region
    $region10: #{tpu_custom_call.1} parent=1 // pred_check
      _
    $region11: #{tpu_custom_call.1} parent=1 // pred_check_branch
      %36 = sbr.rel (0) target = $region13
    $region12: #{tpu_custom_call.1} parent=1 // pred_region
      %38 = vsyncadd [#allocation6], 0
      %s40 = sshll.u32 %s2, 4
      %s41 = int_to_ptr.hbm [resolvable:$true] %s40
      %s42 = sshll.u32 [#allocation7], 4
      %s43 = int_to_ptr.vmem [resolvable:$true] %s42
      %45 = dma.hbm_to_vmem [thread:$0]  %s41, 256, %s43, [#allocation6]
    $region13: #{tpu_custom_call.1} parent=1 // pred_fallthru
      _
    // Predicated region
    $region14: #{tpu_custom_call.1} parent=1 // pred_check
      _
    $region15: #{tpu_custom_call.1} parent=1 // pred_check_branch
      %47 = sbr.rel (0) target = $region17
    $region16: #{tpu_custom_call.1} parent=1 // pred_region
      %49 = vsyncadd [#allocation9], 0
      %s51 = sshll.u32 %s3, 4
      %s52 = int_to_ptr.hbm [resolvable:$true] %s51
      %s53 = sshll.u32 [#allocation8], 4
      %s54 = int_to_ptr.vmem [resolvable:$true] %s53
      %56 = dma.hbm_to_vmem [thread:$0]  %s52, 384, %s54, [#allocation9]
    $region17: #{tpu_custom_call.1} parent=1 // pred_fallthru
      _
    // Predicated region
    $region18: #{tpu_custom_call.1} parent=1 // pred_check
      _
    $region19: #{tpu_custom_call.1} parent=1 // pred_check_branch
      %58 = sbr.rel (0) target = $region21
    $region20: #{tpu_custom_call.1} parent=1 // pred_region
      %60 = dma.done [#allocation3], 16
    $region21: #{tpu_custom_call.1} parent=1 // pred_fallthru
      _
    // Predicated region
    $region22: #{tpu_custom_call.1} parent=1 // pred_check
      _
    $region23: #{tpu_custom_call.1} parent=1 // pred_check_branch
      %62 = sbr.rel (0) target = $region25
    $region24: #{tpu_custom_call.1} parent=1 // pred_region
      %64 = dma.done [#allocation6], 16
    $region25: #{tpu_custom_call.1} parent=1 // pred_fallthru
      _
    // Predicated region
    $region26: #{tpu_custom_call.1} parent=1 // pred_check
      _
    $region27: #{tpu_custom_call.1} parent=1 // pred_check_branch
      %66 = sbr.rel (0) target = $region29
    $region28: #{tpu_custom_call.1} parent=1 // pred_region
      %68 = dma.done [#allocation6], 256
    $region29: #{tpu_custom_call.1} parent=1 // pred_fallthru
      _
    // Predicated region
    $region30: #{tpu_custom_call.1} parent=1 // pred_check
      _
    $region31: #{tpu_custom_call.1} parent=1 // pred_check_branch
      %70 = sbr.rel (0) target = $region33
    $region32: #{tpu_custom_call.1} parent=1 // pred_region
      %72 = dma.done [#allocation9], 384
    $region33: #{tpu_custom_call.1} parent=1 // pred_fallthru
      _
    %v73 = vlaneseq
    %v74 = vshrl.u32 %v73, 7
    %v75 = vadd.s32 %v74, 8
    %v76 = vadd.s32 %v74, 16
    %v77 = vadd.s32 %v74, 24
    %v78 = vadd.s32 %v74, 32
    %v79 = vadd.s32 %v74, 40
    %v80 = vadd.s32 %v74, 48
    %v81 = vadd.s32 %v74, 56
    %v82 = vadd.s32 %v74, 64
    %v83 = vadd.s32 %v74, 72
    %v84 = vadd.s32 %v74, 80
    %v85 = vadd.s32 %v74, 88
    %v86 = vadd.s32 %v74, 96
    %v87 = vadd.s32 %v74, 104
    %v88 = vadd.s32 %v74, 112
    %v89 = vadd.s32 %v74, 120
    %v90 = vadd.s32 %v74, 128
    %v91 = vadd.s32 %v74, 136
    %v92 = vadd.s32 %v74, 144
    %v93 = vadd.s32 %v74, 152
    %v94 = vadd.s32 %v74, 160
    %v95 = vadd.s32 %v74, 168
    %v96 = vadd.s32 %v74, 176
    %v97 = vadd.s32 %v74, 184
    %v98 = vadd.s32 %v74, 192
    %v99 = vadd.s32 %v74, 200
    %v100 = vadd.s32 %v74, 208
    %v101 = vadd.s32 %v74, 216
    %v102 = vadd.s32 %v74, 224
    %v103 = vadd.s32 %v74, 232
    %v104 = vadd.s32 %v74, 240
    %v105 = vadd.s32 %v74, 248
    %v106 = vadd.s32 %v74, 256
    %v107 = vadd.s32 %v74, 264
    %v108 = vadd.s32 %v74, 272
    %v109 = vadd.s32 %v74, 280
    %v110 = vadd.s32 %v74, 288
    %v111 = vadd.s32 %v74, 296
    %v112 = vld [vmem:[#allocation2] sm:$0x1]
    %v113 = vperm.slane %v112, 0
    %vm114 = vcmp.eq.s32.totalorder %v74, %v113
    %vm115 = vcmp.eq.s32.totalorder %v75, %v113
    %vm116 = vcmp.eq.s32.totalorder %v76, %v113
    %vm117 = vcmp.eq.s32.totalorder %v77, %v113
    %vm118 = vcmp.eq.s32.totalorder %v78, %v113
    %vm119 = vcmp.eq.s32.totalorder %v79, %v113
    %vm120 = vcmp.eq.s32.totalorder %v80, %v113
    %vm121 = vcmp.eq.s32.totalorder %v81, %v113
    %vm122 = vcmp.eq.s32.totalorder %v82, %v113
    %vm123 = vcmp.eq.s32.totalorder %v83, %v113
    %vm124 = vcmp.eq.s32.totalorder %v84, %v113
    %vm125 = vcmp.eq.s32.totalorder %v85, %v113
    %vm126 = vcmp.eq.s32.totalorder %v86, %v113
    %vm127 = vcmp.eq.s32.totalorder %v87, %v113
    %vm128 = vcmp.eq.s32.totalorder %v88, %v113
    %vm129 = vcmp.eq.s32.totalorder %v89, %v113
    %vm130 = vcmp.eq.s32.totalorder %v90, %v113
    %vm131 = vcmp.eq.s32.totalorder %v91, %v113
    %vm132 = vcmp.eq.s32.totalorder %v92, %v113
    %vm133 = vcmp.eq.s32.totalorder %v93, %v113
    %vm134 = vcmp.eq.s32.totalorder %v94, %v113
    %vm135 = vcmp.eq.s32.totalorder %v95, %v113
    %vm136 = vcmp.eq.s32.totalorder %v96, %v113
    %vm137 = vcmp.eq.s32.totalorder %v97, %v113
    %vm138 = vcmp.eq.s32.totalorder %v98, %v113
    %v139 = vsel %vm114, 1, 0
    %v140 = vsel %vm115, 1, 0
    %v141 = vsel %vm116, 1, 0
    %v142 = vsel %vm117, 1, 0
    %v143 = vsel %vm118, 1, 0
    %v144 = vsel %vm119, 1, 0
    %v145 = vsel %vm120, 1, 0
    %v146 = vsel %vm121, 1, 0
    %v147 = vsel %vm122, 1, 0
    %v148 = vsel %vm123, 1, 0
    %v149 = vsel %vm124, 1, 0
    %v150 = vsel %vm125, 1, 0
    %v151 = vsel %vm126, 1, 0
    %v152 = vsel %vm127, 1, 0
    %v153 = vsel %vm128, 1, 0
    %v154 = vsel %vm129, 1, 0
    %v155 = vsel %vm130, 1, 0
    %v156 = vsel %vm131, 1, 0
    %v157 = vsel %vm132, 1, 0
    %v158 = vsel %vm133, 1, 0
    %v159 = vsel %vm134, 1, 0
    %v160 = vsel %vm135, 1, 0
    %v161 = vsel %vm136, 1, 0
    %v162 = vsel %vm137, 1, 0
    %v163 = vsel %vm138, 1, 0
    %v164 = vcvt.s32.f32 %v139
    %v165 = vcvt.s32.f32 %v140
    %v166 = vcvt.s32.f32 %v141
    %v167 = vcvt.s32.f32 %v142
    %v168 = vcvt.s32.f32 %v143
    %v169 = vcvt.s32.f32 %v144
    %v170 = vcvt.s32.f32 %v145
    %v171 = vcvt.s32.f32 %v146
    %v172 = vcvt.s32.f32 %v147
    %v173 = vcvt.s32.f32 %v148
    %v174 = vcvt.s32.f32 %v149
    %v175 = vcvt.s32.f32 %v150
    %v176 = vcvt.s32.f32 %v151
    %v177 = vcvt.s32.f32 %v152
    %v178 = vcvt.s32.f32 %v153
    %v179 = vcvt.s32.f32 %v154
    %v180 = vcvt.s32.f32 %v155
    %v181 = vcvt.s32.f32 %v156
    %v182 = vcvt.s32.f32 %v157
    %v183 = vcvt.s32.f32 %v158
    %v184 = vcvt.s32.f32 %v159
    %v185 = vcvt.s32.f32 %v160
    %v186 = vcvt.s32.f32 %v161
    %v187 = vcvt.s32.f32 %v162
    %v188 = vcvt.s32.f32 %v163
    %v189 = vld [vmem:[#allocation5] sm:$0x1]
    %v190 = vperm.slane %v189, 0
    %vm191 = vcmp.eq.s32.totalorder %v74, %v190
    %vm192 = vcmp.eq.s32.totalorder %v75, %v190
    %vm193 = vcmp.eq.s32.totalorder %v76, %v190
    %vm194 = vcmp.eq.s32.totalorder %v77, %v190
    %vm195 = vcmp.eq.s32.totalorder %v78, %v190
    %vm196 = vcmp.eq.s32.totalorder %v79, %v190
    %vm197 = vcmp.eq.s32.totalorder %v80, %v190
    %vm198 = vcmp.eq.s32.totalorder %v81, %v190
    %vm199 = vcmp.eq.s32.totalorder %v82, %v190
    %vm200 = vcmp.eq.s32.totalorder %v83, %v190
    %vm201 = vcmp.eq.s32.totalorder %v84, %v190
    %vm202 = vcmp.eq.s32.totalorder %v85, %v190
    %vm203 = vcmp.eq.s32.totalorder %v86, %v190
    %vm204 = vcmp.eq.s32.totalorder %v87, %v190
    %vm205 = vcmp.eq.s32.totalorder %v88, %v190
    %vm206 = vcmp.eq.s32.totalorder %v89, %v190
    %vm207 = vcmp.eq.s32.totalorder %v90, %v190
    %vm208 = vcmp.eq.s32.totalorder %v91, %v190
    %vm209 = vcmp.eq.s32.totalorder %v92, %v190
    %vm210 = vcmp.eq.s32.totalorder %v93, %v190
    %vm211 = vcmp.eq.s32.totalorder %v94, %v190
    %vm212 = vcmp.eq.s32.totalorder %v95, %v190
    %vm213 = vcmp.eq.s32.totalorder %v96, %v190
    %vm214 = vcmp.eq.s32.totalorder %v97, %v190
    %vm215 = vcmp.eq.s32.totalorder %v98, %v190
    %vm216 = vcmp.eq.s32.totalorder %v99, %v190
    %vm217 = vcmp.eq.s32.totalorder %v100, %v190
    %vm218 = vcmp.eq.s32.totalorder %v101, %v190
    %vm219 = vcmp.eq.s32.totalorder %v102, %v190
    %vm220 = vcmp.eq.s32.totalorder %v103, %v190
    %vm221 = vcmp.eq.s32.totalorder %v104, %v190
    %vm222 = vcmp.eq.s32.totalorder %v105, %v190
    %vm223 = vcmp.eq.s32.totalorder %v106, %v190
    %vm224 = vcmp.eq.s32.totalorder %v107, %v190
    %vm225 = vcmp.eq.s32.totalorder %v108, %v190
    %vm226 = vcmp.eq.s32.totalorder %v109, %v190
    %vm227 = vcmp.eq.s32.totalorder %v110, %v190
    %vm228 = vcmp.eq.s32.totalorder %v111, %v190
    %v229 = vsel %vm191, 1, 0
    %v230 = vsel %vm192, 1, 0
    %v231 = vsel %vm193, 1, 0
    %v232 = vsel %vm194, 1, 0
    %v233 = vsel %vm195, 1, 0
    %v234 = vsel %vm196, 1, 0
    %v235 = vsel %vm197, 1, 0
    %v236 = vsel %vm198, 1, 0
    %v237 = vsel %vm199, 1, 0
    %v238 = vsel %vm200, 1, 0
    %v239 = vsel %vm201, 1, 0
    %v240 = vsel %vm202, 1, 0
    %v241 = vsel %vm203, 1, 0
    %v242 = vsel %vm204, 1, 0
    %v243 = vsel %vm205, 1, 0
    %v244 = vsel %vm206, 1, 0
    %v245 = vsel %vm207, 1, 0
    %v246 = vsel %vm208, 1, 0
    %v247 = vsel %vm209, 1, 0
    %v248 = vsel %vm210, 1, 0
    %v249 = vsel %vm211, 1, 0
    %v250 = vsel %vm212, 1, 0
    %v251 = vsel %vm213, 1, 0
    %v252 = vsel %vm214, 1, 0
    %v253 = vsel %vm215, 1, 0
    %v254 = vsel %vm216, 1, 0
    %v255 = vsel %vm217, 1, 0
    %v256 = vsel %vm218, 1, 0
    %v257 = vsel %vm219, 1, 0
    %v258 = vsel %vm220, 1, 0
    %v259 = vsel %vm221, 1, 0
    %v260 = vsel %vm222, 1, 0
    %v261 = vsel %vm223, 1, 0
    %v262 = vsel %vm224, 1, 0
    %v263 = vsel %vm225, 1, 0
    %v264 = vsel %vm226, 1, 0
    %v265 = vsel %vm227, 1, 0
    %v266 = vsel %vm228, 1, 0
    %v267 = vcvt.s32.f32 %v229
    %v268 = vcvt.s32.f32 %v230
    %v269 = vcvt.s32.f32 %v231
    %v270 = vcvt.s32.f32 %v232
    %v271 = vcvt.s32.f32 %v233
    %v272 = vcvt.s32.f32 %v234
    %v273 = vcvt.s32.f32 %v235
    %v274 = vcvt.s32.f32 %v236
    %v275 = vcvt.s32.f32 %v237
    %v276 = vcvt.s32.f32 %v238
    %v277 = vcvt.s32.f32 %v239
    %v278 = vcvt.s32.f32 %v240
    %v279 = vcvt.s32.f32 %v241
    %v280 = vcvt.s32.f32 %v242
    %v281 = vcvt.s32.f32 %v243
    %v282 = vcvt.s32.f32 %v244
    %v283 = vcvt.s32.f32 %v245
    %v284 = vcvt.s32.f32 %v246
    %v285 = vcvt.s32.f32 %v247
    %v286 = vcvt.s32.f32 %v248
    %v287 = vcvt.s32.f32 %v249
    %v288 = vcvt.s32.f32 %v250
    %v289 = vcvt.s32.f32 %v251
    %v290 = vcvt.s32.f32 %v252
    %v291 = vcvt.s32.f32 %v253
    %v292 = vcvt.s32.f32 %v254
    %v293 = vcvt.s32.f32 %v255
    %v294 = vcvt.s32.f32 %v256
    %v295 = vcvt.s32.f32 %v257
    %v296 = vcvt.s32.f32 %v258
    %v297 = vcvt.s32.f32 %v259
    %v298 = vcvt.s32.f32 %v260
    %v299 = vcvt.s32.f32 %v261
    %v300 = vcvt.s32.f32 %v262
    %v301 = vcvt.s32.f32 %v263
    %v302 = vcvt.s32.f32 %v264
    %v303 = vcvt.s32.f32 %v265
    %v304 = vcvt.s32.f32 %v266
    %v305 = vld [vmem:[#allocation7] sm:$0xff]
    %v306 = vld [vmem:[#allocation7 + $0x8] sm:$0xff]
    %vm307 = vcmask 588800
    %v309 = vsel %vm307, %v306, 0
    %311 = vmatpush.msra.mxu0 %v179
    %312 = vmatpush.msra.mxu0 %v178
    %313 = vmatpush.msra.mxu0 %v177
    %314 = vmatpush.msra.mxu0 %v176
    %315 = vmatpush.msra.mxu0 %v175
    %316 = vmatpush.msra.mxu0 %v174
    %317 = vmatpush.msra.mxu0 %v173
    %318 = vmatpush.msra.mxu0 %v172
    %319 = vmatpush.msra.mxu0 %v171
    %320 = vmatpush.msra.mxu0 %v170
    %321 = vmatpush.msra.mxu0 %v169
    %322 = vmatpush.msra.mxu0 %v168
    %323 = vmatpush.msra.mxu0 %v167
    %324 = vmatpush.msra.mxu0 %v166
    %325 = vmatpush.msra.mxu0 %v165
    %326 = vmatpush.msra.mxu0 %v164
    %327 = vmatmul.f32.gmra.mxu0 %v305
    %v328 = vpop.f32.mrf.mxu0
    %v329 = vadd.f32 0.0, %v328
    %330 = vdwg.mxu0
    %331 = vmatpush.msra.mxu0 0.0
    %332 = vmatpush.msra.mxu0 0.0
    %333 = vmatpush.msra.mxu0 0.0
    %334 = vmatpush.msra.mxu0 0.0
    %335 = vmatpush.msra.mxu0 0.0
    %336 = vmatpush.msra.mxu0 0.0
    %337 = vmatpush.msra.mxu0 0.0
    %338 = vmatpush.msra.mxu0 %v188
    %339 = vmatpush.msra.mxu0 %v187
    %340 = vmatpush.msra.mxu0 %v186
    %341 = vmatpush.msra.mxu0 %v185
    %342 = vmatpush.msra.mxu0 %v184
    %343 = vmatpush.msra.mxu0 %v183
    %344 = vmatpush.msra.mxu0 %v182
    %345 = vmatpush.msra.mxu0 %v181
    %346 = vmatpush.msra.mxu0 %v180
    %347 = vmatmul.f32.gmra.mxu0 %v309
    %v348 = vpop.f32.mrf.mxu0
    %v349 = vadd.f32 %v329, %v348
    %350 = vdwg.mxu0
    %v351 = vld [vmem:[#allocation8] sm:$0xff]
    %v352 = vld [vmem:[#allocation8 + $0x8] sm:$0xff]
    %v353 = vld [vmem:[#allocation8 + $0x10] sm:$0xff]
    %vm354 = vcmask 359424
    %v356 = vsel %vm354, %v353, 0
    %vm358 = vcmask 1043456
    %v360 = vsel %vm358, %v304, 0
    %362 = vmatpush.msra.mxu0 %v282
    %363 = vmatpush.msra.mxu0 %v281
    %364 = vmatpush.msra.mxu0 %v280
    %365 = vmatpush.msra.mxu0 %v279
    %366 = vmatpush.msra.mxu0 %v278
    %367 = vmatpush.msra.mxu0 %v277
    %368 = vmatpush.msra.mxu0 %v276
    %369 = vmatpush.msra.mxu0 %v275
    %370 = vmatpush.msra.mxu0 %v274
    %371 = vmatpush.msra.mxu0 %v273
    %372 = vmatpush.msra.mxu0 %v272
    %373 = vmatpush.msra.mxu0 %v271
    %374 = vmatpush.msra.mxu0 %v270
    %375 = vmatpush.msra.mxu0 %v269
    %376 = vmatpush.msra.mxu0 %v268
    %377 = vmatpush.msra.mxu0 %v267
    %378 = vmatmul.f32.gmra.mxu0 %v351
    %v379 = vpop.f32.mrf.mxu0
    %v380 = vadd.f32 0.0, %v379
    %381 = vdwg.mxu0
    %382 = vmatpush.msra.mxu0 %v298
    %383 = vmatpush.msra.mxu0 %v297
    %384 = vmatpush.msra.mxu0 %v296
    %385 = vmatpush.msra.mxu0 %v295
    %386 = vmatpush.msra.mxu0 %v294
    %387 = vmatpush.msra.mxu0 %v293
    %388 = vmatpush.msra.mxu0 %v292
    %389 = vmatpush.msra.mxu0 %v291
    %390 = vmatpush.msra.mxu0 %v290
    %391 = vmatpush.msra.mxu0 %v289
    %392 = vmatpush.msra.mxu0 %v288
    %393 = vmatpush.msra.mxu0 %v287
    %394 = vmatpush.msra.mxu0 %v286
    %395 = vmatpush.msra.mxu0 %v285
    %396 = vmatpush.msra.mxu0 %v284
    %397 = vmatpush.msra.mxu0 %v283
    %398 = vmatmul.f32.gmra.mxu0 %v352
    %v399 = vpop.f32.mrf.mxu0
    %v400 = vadd.f32 %v380, %v399
    %401 = vdwg.mxu0
    %402 = vmatpush.msra.mxu0 0.0
    %403 = vmatpush.msra.mxu0 0.0
    %404 = vmatpush.msra.mxu0 0.0
    %405 = vmatpush.msra.mxu0 0.0
    %406 = vmatpush.msra.mxu0 0.0
    %407 = vmatpush.msra.mxu0 0.0
    %408 = vmatpush.msra.mxu0 0.0
    %409 = vmatpush.msra.mxu0 0.0
    %410 = vmatpush.msra.mxu0 0.0
    %411 = vmatpush.msra.mxu0 0.0
    %412 = vmatpush.msra.mxu0 %v360
    %413 = vmatpush.msra.mxu0 %v303
    %414 = vmatpush.msra.mxu0 %v302
    %415 = vmatpush.msra.mxu0 %v301
    %416 = vmatpush.msra.mxu0 %v300
    %417 = vmatpush.msra.mxu0 %v299
    %418 = vmatmul.f32.gmra.mxu0 %v356
    %v419 = vpop.f32.mrf.mxu0
    %v420 = vadd.f32 %v400, %v419
    %421 = vdwg.mxu0
    %v422 = vmul.f32 %v349, %v420
    %v423 = vrot.slane %v422, 4
    %v424 = vadd.f32 %v422, %v423
    %v425 = vrot.slane %v424, 2
    %v426 = vadd.f32 %v424, %v425
    %v427 = vrot.slane %v426, 1
    %v428 = vadd.f32 %v426, %v427
    %429 = vst [vmem:[#allocation10] sm:$0x1] %v428
    // Predicated region
    $region34: #{tpu_custom_call.1} parent=1 // pred_check
      _
    $region35: #{tpu_custom_call.1} parent=1 // pred_check_branch
      %431 = sbr.rel (0) target = $region37
    $region36: #{tpu_custom_call.1} parent=1 // pred_region
      %433 = vsyncadd [#allocation4], 0
      %s435 = sshll.u32 [#allocation10], 4
      %s436 = int_to_ptr.vmem [resolvable:$true] %s435
      %s437 = sshll.u32 %s4, 4
      %s438 = int_to_ptr.hbm [resolvable:$true] %s437
      %440 = dma.vmem_to_hbm [thread:$0]  %s436, 16, %s438, [#allocation4]
    $region37: #{tpu_custom_call.1} parent=1 // pred_fallthru
      _
    // Predicated region
    $region38: #{tpu_custom_call.1} parent=1 // pred_check
      _
    $region39: #{tpu_custom_call.1} parent=1 // pred_check_branch
      %442 = sbr.rel (0) target = $region41
    $region40: #{tpu_custom_call.1} parent=1 // pred_region
      %444 = dma.done [#allocation4], 16
    $region41: #{tpu_custom_call.1} parent=1 // pred_fallthru
      _
    %445 = vsyncpa [#allocation3], 1
    %446 = vsyncpa [#allocation6], 1
    %447 = vsyncpa [#allocation9], 1
    %448 = vsyncpa [#allocation4], 1

</llo_original>
